<compile_context>
chip_gen: v5e
topology: v5e:2x2
jax: 0.10.0
libtpu: 0.0.40
codegen_flags: <defaults>
</compile_context>

<pallas_src>
import math

import jax
import jax.numpy as jnp
from jax.experimental import pallas as pl
from jax.experimental.pallas import tpu as pltpu

LANE = 128      # vreg lane width  -> last-dim alignment unit
SUBLANE = 8     # vreg sublane cnt -> second-to-last-dim alignment unit


def _round_up(n, m):
    return ((n + m - 1) // m) * m


def _cdiv(a, b):
    return -(-a // b)


# ---------------------------------------------------------------------------
# Kernels
# ---------------------------------------------------------------------------
def _mlp_body(x, w1, b1, w2, b2, w3, b3):
    """relu(x@W1+b1) -> relu(@W2+b2) -> @W3+b3.

    x arrives f32 and is cast to the weight dtype (bf16) in-kernel; matmuls run on
    the MXU with f32 accumulation; bias add + ReLU stay in f32 (no bf16 VPU on v5e).
    """
    x = x.astype(w1.dtype)
    h1 = jnp.dot(x, w1, preferred_element_type=jnp.float32) + b1
    h1 = jnp.maximum(h1, 0.0).astype(w2.dtype)
    h2 = jnp.dot(h1, w2, preferred_element_type=jnp.float32) + b2
    h2 = jnp.maximum(h2, 0.0).astype(w3.dtype)
    return jnp.dot(h2, w3, preferred_element_type=jnp.float32) + b3


def dqn_kernel(x_ref, w1_ref, b1_ref, w2_ref, b2_ref, w3_ref, b3_ref, q_ref):
    """Single MLP forward. Also serves the packed dual path (block-diagonal weights)."""
    q_ref[...] = _mlp_body(
        x_ref[...],
        w1_ref[...], b1_ref[...],
        w2_ref[...], b2_ref[...],
        w3_ref[...], b3_ref[...],
    ).astype(q_ref.dtype)


def dqn_dual_kernel_narrow(x_ref, w1c_ref, b1c_ref,
                           w2a_ref, b2a_ref, w3a_ref, b3a_ref,
                           w2b_ref, b2b_ref, w3b_ref, b3b_ref,
                           qa_ref, qb_ref):
    """v5e fallback: layer-1 N-concat (shared x) + separate 128-wide layers 2/3."""
    h1 = w2a_ref.shape[0]
    x = x_ref[...].astype(w1c_ref.dtype)
    h1c = jnp.dot(x, w1c_ref[...], preferred_element_type=jnp.float32) + b1c_ref[...]
    h1c = jnp.maximum(h1c, 0.0)

    def tail(h, w2, b2, w3, b3):
        h = h.astype(w2.dtype)
        h2 = jnp.dot(h, w2, preferred_element_type=jnp.float32) + b2
        h2 = jnp.maximum(h2, 0.0).astype(w3.dtype)
        return jnp.dot(h2, w3, preferred_element_type=jnp.float32) + b3

    qa_ref[...] = tail(h1c[:, :h1], w2a_ref[...], b2a_ref[...],
                       w3a_ref[...], b3a_ref[...]).astype(qa_ref.dtype)
    qb_ref[...] = tail(h1c[:, h1:], w2b_ref[...], b2b_ref[...],
                       w3b_ref[...], b3b_ref[...]).astype(qb_ref.dtype)


# ---------------------------------------------------------------------------
# Parameter prep (call once per param update; keep out of the hot forward path)
# ---------------------------------------------------------------------------
def prep_dqn_params(params, compute_dtype=jnp.bfloat16):
    """Cast weights to the MXU dtype and zero-pad the output layer to a lane-dense
    128 columns (unmasked vst).  Biases stay f32 (f32 epilogue)."""
    out_dim = params["w3"].shape[1]
    out_pad = _round_up(max(out_dim, LANE), LANE)
    w3, b3 = params["w3"], params["b3"]
    if out_pad != out_dim:
        w3 = jnp.pad(w3, ((0, 0), (0, out_pad - out_dim)))
        b3 = jnp.pad(b3, ((0, 0), (0, out_pad - out_dim)))
    return {
        "w1": params["w1"].astype(compute_dtype), "b1": params["b1"].astype(jnp.float32),
        "w2": params["w2"].astype(compute_dtype), "b2": params["b2"].astype(jnp.float32),
        "w3": w3.astype(compute_dtype), "b3": b3.astype(jnp.float32),
        "out_dim": out_dim, "out_pad": out_pad,
    }


def _block_diag(a, b):
    z_ab = jnp.zeros((a.shape[0], b.shape[1]), a.dtype)
    z_ba = jnp.zeros((b.shape[0], a.shape[1]), a.dtype)
    return jnp.concatenate(
        [jnp.concatenate([a, z_ab], axis=1),
         jnp.concatenate([z_ba, b], axis=1)], axis=0)


def _mxu_is_256_wide():
    """True on v6e/v7x (256x256 MXU) -> pack dual nets into 256-wide matmuls."""
    try:
        kind = jax.devices()[0].device_kind.lower()
        return ("v6" in kind) or ("v7" in kind)
    except Exception:  # unknown backend: packing is the safe default
        return True


def prep_dqn_dual(online_params, target_params, compute_dtype=jnp.bfloat16, pack=None):
    """Pack online + target networks for a single fused forward.

    pack=True  -> 256-wide concatenated/block-diagonal weights (v6e/v7x MXU-filling).
    pack=False -> layer-1 concat only; layers 2/3 stay 128-wide (v5e MXU tiles).
    pack=None  -> auto-detect from the local TPU generation.
    """
    if pack is None:
        pack = _mxu_is_256_wide()
    po = prep_dqn_params(online_params, compute_dtype)
    pt = prep_dqn_params(target_params, compute_dtype)
    w1c = jnp.concatenate([po["w1"], pt["w1"]], axis=1)
    b1c = jnp.concatenate([po["b1"], pt["b1"]], axis=1)
    if pack:
        return {
            "packed": True,
            "w1": w1c, "b1": b1c,
            "w2": _block_diag(po["w2"], pt["w2"]),
            "b2": jnp.concatenate([po["b2"], pt["b2"]], axis=1),
            "w3": _block_diag(po["w3"], pt["w3"]),
            "b3": jnp.concatenate([po["b3"], pt["b3"]], axis=1),
            "out_dim": po["out_dim"], "out_pad": po["out_pad"],
        }
    return {
        "packed": False,
        "w1c": w1c, "b1c": b1c,
        "online": po, "target": pt,
        "out_dim": po["out_dim"], "out_pad": po["out_pad"],
    }


# ---------------------------------------------------------------------------
# Batch tiling
# ---------------------------------------------------------------------------
def _batch_tiling(B, batch_tile):
    """cdiv-based tiling: minimal sublane padding, >=2 grid steps for big batches
    so v7x's two TensorCores both get work (no effect on single-TC v5e/v6e)."""
    b_min = _round_up(max(B, SUBLANE), SUBLANE)
    n_steps = _cdiv(b_min, batch_tile)
    if b_min >= 1024:
        n_steps = max(n_steps, 2)
    tile_b = _round_up(_cdiv(b_min, n_steps), SUBLANE)
    b_pad = tile_b * n_steps
    return tile_b, b_pad, n_steps


def _pad_batch(x, b_pad):
    B = x.shape[0]
    if b_pad != B:
        x = jnp.pad(x, ((0, b_pad - B), (0, 0)))
    return x


def _full_spec(arr):
    return pl.BlockSpec(arr.shape, lambda i: (0, 0))


# ---------------------------------------------------------------------------
# Public forward passes
# ---------------------------------------------------------------------------
def _run_mlp(x, w1, b1, w2, b2, w3, b3, *, out_dtype, batch_tile):
    """Batch-tiled pallas_call around dqn_kernel; returns the padded (b_pad, N) slab."""
    B, in_dim = x.shape
    tile_b, b_pad, n_steps = _batch_tiling(B, batch_tile)
    x_p = _pad_batch(x, b_pad)
    h1, h2, out_w = w1.shape[1], w2.shape[1], w3.shape[1]

    wbytes = jnp.dtype(w1.dtype).itemsize
    flops = 2 * b_pad * (in_dim * h1 + h1 * h2 + h2 * out_w)
    bytes_accessed = (x_p.size * x_p.dtype.itemsize
                      + (w1.size + w2.size + w3.size) * wbytes
                      + (b1.size + b2.size + b3.size) * 4
                      + b_pad * out_w * jnp.dtype(out_dtype).itemsize)

    return pl.pallas_call(
        dqn_kernel,
        out_shape=jax.ShapeDtypeStruct((b_pad, out_w), out_dtype),
        grid=(n_steps,),
        in_specs=[
            pl.BlockSpec((tile_b, in_dim), lambda i: (i, 0)),
            _full_spec(w1), _full_spec(b1),
            _full_spec(w2), _full_spec(b2),
            _full_spec(w3), _full_spec(b3),
        ],
        out_specs=pl.BlockSpec((tile_b, out_w), lambda i: (i, 0)),
        compiler_params=pltpu.CompilerParams(
            dimension_semantics=("parallel",)),
        cost_estimate=pl.CostEstimate(
            flops=flops, transcendentals=0, bytes_accessed=bytes_accessed),
    )(x_p, w1, b1, w2, b2, w3, b3)


def dqn_forward(x, prepped, *, out_dtype=jnp.float32, batch_tile=1024):
    """Single-network DQN forward. x: (B, input_dim) f32 -> (B, output_dim)."""
    B = x.shape[0]
    q = _run_mlp(x, prepped["w1"], prepped["b1"], prepped["w2"], prepped["b2"],
                 prepped["w3"], prepped["b3"], out_dtype=out_dtype, batch_tile=batch_tile)
    return q[:B, :prepped["out_dim"]]


def dqn_forward_dual(x, prepped_dual, *, out_dtype=jnp.float32, batch_tile=1024):
    """Fused online + target network forward (single pallas_call, shared x DMA).

    Returns (q_online, q_target), each (B, output_dim).
    """
    B, in_dim = x.shape
    out_dim, out_pad = prepped_dual["out_dim"], prepped_dual["out_pad"]

    if prepped_dual["packed"]:
        # One MLP over block-diagonal weights: output slab is [qa | qb].
        q = _run_mlp(x, prepped_dual["w1"], prepped_dual["b1"],
                     prepped_dual["w2"], prepped_dual["b2"],
                     prepped_dual["w3"], prepped_dual["b3"],
                     out_dtype=out_dtype, batch_tile=batch_tile)
        return q[:B, :out_dim], q[:B, out_pad:out_pad + out_dim]

    # v5e fallback: layer-1 concat + separate 128-wide layers 2/3.
    po, pt = prepped_dual["online"], prepped_dual["target"]
    w1c, b1c = prepped_dual["w1c"], prepped_dual["b1c"]
    tile_b, b_pad, n_steps = _batch_tiling(B, batch_tile)
    x_p = _pad_batch(x, b_pad)
    h1, h2 = po["w2"].shape[0], po["w2"].shape[1]

    wbytes = jnp.dtype(w1c.dtype).itemsize
    flops = 2 * b_pad * (in_dim * 2 * h1 + 2 * (h1 * h2 + h2 * out_pad))
    bytes_accessed = (x_p.size * x_p.dtype.itemsize
                      + (w1c.size + 2 * (po["w2"].size + po["w3"].size)) * wbytes
                      + (b1c.size + 2 * (po["b2"].size + po["b3"].size)) * 4
                      + 2 * b_pad * out_pad * jnp.dtype(out_dtype).itemsize)

    out_spec = pl.BlockSpec((tile_b, out_pad), lambda i: (i, 0))
    qa, qb = pl.pallas_call(
        dqn_dual_kernel_narrow,
        out_shape=(jax.ShapeDtypeStruct((b_pad, out_pad), out_dtype),
                   jax.ShapeDtypeStruct((b_pad, out_pad), out_dtype)),
        grid=(n_steps,),
        in_specs=[
            pl.BlockSpec((tile_b, in_dim), lambda i: (i, 0)),
            _full_spec(w1c), _full_spec(b1c),
            _full_spec(po["w2"]), _full_spec(po["b2"]),
            _full_spec(po["w3"]), _full_spec(po["b3"]),
            _full_spec(pt["w2"]), _full_spec(pt["b2"]),
            _full_spec(pt["w3"]), _full_spec(pt["b3"]),
        ],
        out_specs=[out_spec, out_spec],
        compiler_params=pltpu.CompilerParams(
            dimension_semantics=("parallel",)),
        cost_estimate=pl.CostEstimate(
            flops=flops, transcendentals=0, bytes_accessed=bytes_accessed),
    )(x_p, w1c, b1c,
      po["w2"], po["b2"], po["w3"], po["b3"],
      pt["w2"], pt["b2"], pt["w3"], pt["b3"])
    return qa[:B, :out_dim], qb[:B, :out_dim]


# ---------------------------------------------------------------------------
# Init (matches the PyTorch module) + pure-JAX reference
# ---------------------------------------------------------------------------
def xavier_uniform(key, fan_in, fan_out, gain=1.0, dtype=jnp.float32):
    """torch.nn.init.xavier_uniform_ statistics, emitted in (in, out) layout."""
    bound = gain * math.sqrt(6.0 / (fan_in + fan_out))
    return jax.random.uniform(key, (fan_in, fan_out), dtype, minval=-bound, maxval=bound)


def init_dqn_params(key, input_dim, output_dim, hidden_dims=(128, 128)):
    k1, k2, k3 = jax.random.split(key, 3)
    h1, h2 = hidden_dims
    return {
        "w1": xavier_uniform(k1, input_dim, h1),
        "b1": jnp.zeros((1, h1), jnp.float32),
        "w2": xavier_uniform(k2, h1, h2),
        "b2": jnp.zeros((1, h2), jnp.float32),
        "w3": xavier_uniform(k3, h2, output_dim, gain=0.1),
        "b3": jnp.zeros((1, output_dim), jnp.float32),
    }


def dqn_reference(x, params, compute_dtype=jnp.float32):
    """Pure-JAX reference. With compute_dtype=bf16 it mirrors the kernel's cast points."""
    cd = compute_dtype
    h1 = jnp.dot(x.astype(cd), params["w1"].astype(cd),
                 preferred_element_type=jnp.float32) + params["b1"]
    h1 = jnp.maximum(h1, 0.0)
    h2 = jnp.dot(h1.astype(cd), params["w2"].astype(cd),
                 preferred_element_type=jnp.float32) + params["b2"]
    h2 = jnp.maximum(h2, 0.0)
    return jnp.dot(h2.astype(cd), params["w3"].astype(cd),
                   preferred_element_type=jnp.float32) + params["b3"]


if __name__ == "__main__":
    key = jax.random.PRNGKey(0)
    k_online, k_target, k_x = jax.random.split(key, 3)

    # Small DQN: obs dim 16, action dim 4, hidden [128, 128], batch 2.
    input_dim, output_dim, batch = 16, 4, 2
    online = init_dqn_params(k_online, input_dim, output_dim, hidden_dims=(128, 128))
    target = init_dqn_params(k_target, input_dim, output_dim, hidden_dims=(128, 128))
    x = jax.random.normal(k_x, (batch, input_dim), jnp.float32)

    # Param prep happens once (cached outside the hot path).
    p_single = prep_dqn_params(online)
    p_dual_packed = prep_dqn_dual(online, target, pack=True)    # v6e/v7x path
    p_dual_narrow = prep_dqn_dual(online, target, pack=False)   # v5e path

    q = dqn_forward(x, p_single)
    qp_on, qp_tg = dqn_forward_dual(x, p_dual_packed)
    qn_on, qn_tg = dqn_forward_dual(x, p_dual_narrow)
    jax.block_until_ready((q, qp_on, qp_tg, qn_on, qn_tg))

    assert q.shape == (batch, output_dim), q.shape
    assert qp_on.shape == (batch, output_dim) and qp_tg.shape == (batch, output_dim)
    assert qn_on.shape == (batch, output_dim) and qn_tg.shape == (batch, output_dim)

    # Correctness vs a reference that uses the same bf16 cast points.
    ref_on_bf16 = dqn_reference(x, online, compute_dtype=jnp.bfloat16)
    ref_tg_bf16 = dqn_reference(x, target, compute_dtype=jnp.bfloat16)
    assert jnp.allclose(q, ref_on_bf16, atol=5e-3, rtol=5e-3), "single-net mismatch"
    assert jnp.allclose(qp_on, ref_on_bf16, atol=5e-3, rtol=5e-3), "packed dual online mismatch"
    assert jnp.allclose(qp_tg, ref_tg_bf16, atol=5e-3, rtol=5e-3), "packed dual target mismatch"
    assert jnp.allclose(qn_on, ref_on_bf16, atol=5e-3, rtol=5e-3), "narrow dual online mismatch"
    assert jnp.allclose(qn_tg, ref_tg_bf16, atol=5e-3, rtol=5e-3), "narrow dual target mismatch"

    # Packed vs narrow vs single should agree very tightly (same bf16 matmul values;
    # the block-diagonal zeros add exact zeros into the f32 accumulation).
    assert jnp.allclose(qp_on, qn_on, atol=1e-5, rtol=1e-5), "packed vs narrow online mismatch"
    assert jnp.allclose(qp_tg, qn_tg, atol=1e-5, rtol=1e-5), "packed vs narrow target mismatch"
    assert jnp.allclose(q, qp_on, atol=1e-5, rtol=1e-5), "single vs fused mismatch"

    # Exercise the awkward-batch tiling path (B not a multiple of the sublane count).
    x_odd = jax.random.normal(k_x, (13, input_dim), jnp.float32)
    q_odd = dqn_forward(x_odd, p_single)
    jax.block_until_ready(q_odd)
    assert q_odd.shape == (13, output_dim)
    assert jnp.allclose(q_odd, dqn_reference(x_odd, online, compute_dtype=jnp.bfloat16),
                        atol=5e-3, rtol=5e-3), "odd-batch mismatch"

    # Loose sanity check against the full-f32 PyTorch-equivalent forward.
    ref_on_f32 = dqn_reference(x, online, compute_dtype=jnp.float32)
    assert jnp.allclose(q, ref_on_f32, atol=5e-2, rtol=5e-2), "bf16 drift too large"

    print("KERNEL_OK")
</pallas_src>

<mosaic_0001>
module attributes {stable_mosaic.version = 11 : i64} {
  func.func @dqn_kernel(%arg0: i32, %arg1: memref<8x16xf32, #tpu.memory_space<vmem>>, %arg2: memref<16x128xbf16, #tpu.memory_space<vmem>>, %arg3: memref<1x128xf32, #tpu.memory_space<vmem>>, %arg4: memref<128x128xbf16, #tpu.memory_space<vmem>>, %arg5: memref<1x128xf32, #tpu.memory_space<vmem>>, %arg6: memref<128x128xbf16, #tpu.memory_space<vmem>>, %arg7: memref<1x128xf32, #tpu.memory_space<vmem>>, %arg8: memref<8x128xf32, #tpu.memory_space<vmem>>) attributes {dimension_semantics = [#tpu.dimension_semantics<parallel>], iteration_bounds = array<i64: 1>, scalar_prefetch = 0 : i64, scratch_operands = 0 : i64, tpu.core_type = #tpu.core_type<tc>, window_params = [{transform_indices = @transform_0, window_bounds = array<i64: 8, 16>}, {pipeline_mode = #tpu.pipeline_mode<synchronous>, transform_indices = @transform_1, window_bounds = array<i64: 16, 128>}, {pipeline_mode = #tpu.pipeline_mode<synchronous>, transform_indices = @transform_2, window_bounds = array<i64: 1, 128>}, {pipeline_mode = #tpu.pipeline_mode<synchronous>, transform_indices = @transform_3, window_bounds = array<i64: 128, 128>}, {pipeline_mode = #tpu.pipeline_mode<synchronous>, transform_indices = @transform_4, window_bounds = array<i64: 1, 128>}, {pipeline_mode = #tpu.pipeline_mode<synchronous>, transform_indices = @transform_5, window_bounds = array<i64: 128, 128>}, {pipeline_mode = #tpu.pipeline_mode<synchronous>, transform_indices = @transform_6, window_bounds = array<i64: 1, 128>}, {transform_indices = @transform_7, window_bounds = array<i64: 8, 128>}]} {
    %c0 = arith.constant 0 : index
    %c0_0 = arith.constant 0 : index
    %0 = vector.load %arg1[%c0, %c0_0] : memref<8x16xf32, #tpu.memory_space<vmem>>, vector<8x16xf32>
    %c0_1 = arith.constant 0 : index
    %c0_2 = arith.constant 0 : index
    %1 = vector.load %arg2[%c0_1, %c0_2] : memref<16x128xbf16, #tpu.memory_space<vmem>>, vector<16x128xbf16>
    %c0_3 = arith.constant 0 : index
    %c0_4 = arith.constant 0 : index
    %2 = vector.load %arg3[%c0_3, %c0_4] : memref<1x128xf32, #tpu.memory_space<vmem>>, vector<1x128xf32>
    %c0_5 = arith.constant 0 : index
    %c0_6 = arith.constant 0 : index
    %3 = vector.load %arg4[%c0_5, %c0_6] : memref<128x128xbf16, #tpu.memory_space<vmem>>, vector<128x128xbf16>
    %c0_7 = arith.constant 0 : index
    %c0_8 = arith.constant 0 : index
    %4 = vector.load %arg5[%c0_7, %c0_8] : memref<1x128xf32, #tpu.memory_space<vmem>>, vector<1x128xf32>
    %c0_9 = arith.constant 0 : index
    %c0_10 = arith.constant 0 : index
    %5 = vector.load %arg6[%c0_9, %c0_10] : memref<128x128xbf16, #tpu.memory_space<vmem>>, vector<128x128xbf16>
    %c0_11 = arith.constant 0 : index
    %c0_12 = arith.constant 0 : index
    %6 = vector.load %arg7[%c0_11, %c0_12] : memref<1x128xf32, #tpu.memory_space<vmem>>, vector<1x128xf32>
    %7 = arith.truncf %0 : vector<8x16xf32> to vector<8x16xbf16>
    %cst = arith.constant dense<0.000000e+00> : vector<8x128xf32>
    %8 = tpu.matmul %7, %1, %cst {dimension_numbers = #tpu.dot_dimension_numbers<[1], [0], [0], [1], [0, 0, 1, 1], [], []>} : vector<8x16xbf16>, vector<16x128xbf16>, vector<8x128xf32> -> vector<8x128xf32>
    %9 = vector.broadcast %2 : vector<1x128xf32> to vector<8x128xf32>
    %10 = arith.addf %8, %9 : vector<8x128xf32>
    %cst_13 = arith.constant 0.000000e+00 : f32
    %11 = vector.broadcast %cst_13 : f32 to vector<8x128xf32>
    %12 = arith.maximumf %10, %11 : vector<8x128xf32>
    %13 = arith.truncf %12 : vector<8x128xf32> to vector<8x128xbf16>
    %cst_14 = arith.constant dense<0.000000e+00> : vector<8x128xf32>
    %14 = tpu.matmul %13, %3, %cst_14 {dimension_numbers = #tpu.dot_dimension_numbers<[1], [0], [0], [1], [0, 0, 1, 1], [], []>} : vector<8x128xbf16>, vector<128x128xbf16>, vector<8x128xf32> -> vector<8x128xf32>
    %15 = vector.broadcast %4 : vector<1x128xf32> to vector<8x128xf32>
    %16 = arith.addf %14, %15 : vector<8x128xf32>
    %cst_15 = arith.constant 0.000000e+00 : f32
    %17 = vector.broadcast %cst_15 : f32 to vector<8x128xf32>
    %18 = arith.maximumf %16, %17 : vector<8x128xf32>
    %19 = arith.truncf %18 : vector<8x128xf32> to vector<8x128xbf16>
    %cst_16 = arith.constant dense<0.000000e+00> : vector<8x128xf32>
    %20 = tpu.matmul %19, %5, %cst_16 {dimension_numbers = #tpu.dot_dimension_numbers<[1], [0], [0], [1], [0, 0, 1, 1], [], []>} : vector<8x128xbf16>, vector<128x128xbf16>, vector<8x128xf32> -> vector<8x128xf32>
    %21 = vector.broadcast %6 : vector<1x128xf32> to vector<8x128xf32>
    %22 = arith.addf %20, %21 : vector<8x128xf32>
    %c0_17 = arith.constant 0 : index
    %c0_18 = arith.constant 0 : index
    %23 = vector.load %arg8[%c0_17, %c0_18] : memref<8x128xf32, #tpu.memory_space<vmem>>, vector<8x128xf32>
    tpu.vector_store %arg8[%c0_17, %c0_18], %22 {strides = array<i32>} : memref<8x128xf32, #tpu.memory_space<vmem>>, vector<8x128xf32>,
    return
  }
  func.func @transform_0(%arg0: i32) -> (i32, i32) {
    %c0_i32 = arith.constant 0 : i32
    %c0_i32_0 = arith.constant 0 : i32
    return %arg0, %c0_i32 : i32, i32
  }
  func.func @transform_1(%arg0: i32) -> (i32, i32) {
    %c0_i32 = arith.constant 0 : i32
    %c0_i32_0 = arith.constant 0 : i32
    %c0_i32_1 = arith.constant 0 : i32
    return %c0_i32, %c0_i32_0 : i32, i32
  }
  func.func @transform_2(%arg0: i32) -> (i32, i32) {
    %c0_i32 = arith.constant 0 : i32
    %c0_i32_0 = arith.constant 0 : i32
    %c0_i32_1 = arith.constant 0 : i32
    return %c0_i32, %c0_i32_0 : i32, i32
  }
  func.func @transform_3(%arg0: i32) -> (i32, i32) {
    %c0_i32 = arith.constant 0 : i32
    %c0_i32_0 = arith.constant 0 : i32
    %c0_i32_1 = arith.constant 0 : i32
    return %c0_i32, %c0_i32_0 : i32, i32
  }
  func.func @transform_4(%arg0: i32) -> (i32, i32) {
    %c0_i32 = arith.constant 0 : i32
    %c0_i32_0 = arith.constant 0 : i32
    %c0_i32_1 = arith.constant 0 : i32
    return %c0_i32, %c0_i32_0 : i32, i32
  }
  func.func @transform_5(%arg0: i32) -> (i32, i32) {
    %c0_i32 = arith.constant 0 : i32
    %c0_i32_0 = arith.constant 0 : i32
    %c0_i32_1 = arith.constant 0 : i32
    return %c0_i32, %c0_i32_0 : i32, i32
  }
  func.func @transform_6(%arg0: i32) -> (i32, i32) {
    %c0_i32 = arith.constant 0 : i32
    %c0_i32_0 = arith.constant 0 : i32
    %c0_i32_1 = arith.constant 0 : i32
    return %c0_i32, %c0_i32_0 : i32, i32
  }
  func.func @transform_7(%arg0: i32) -> (i32, i32) {
    %c0_i32 = arith.constant 0 : i32
    %c0_i32_0 = arith.constant 0 : i32
    return %arg0, %c0_i32 : i32, i32
  }
}

</mosaic_0001>

<llo_original>
// kernel: tpu_custom_call.1
$region0: #{tpu_custom_call.1}
  #allocation0 [shape = 'u32[]', space=smem, size = 0x4, offset = 0x4, fixed_abs, tag = 'smem constant byte address 0x4 - core index']
  #allocation1 [shape = 'u32[72,128]{1,0:T(1,128)}', space=vmem, size = 0x9000, scoped, tag = 'internal scratch']
  %s0 = inlined_call_operand.hbm [shape: f32[8,16], index: 0, kind: input, shape index: {}]
  %s1 = inlined_call_operand.hbm [shape: bf16[16,128], index: 1, kind: input, shape index: {}]
  %s2 = inlined_call_operand.vmem [shape: f32[1,128], index: 2, kind: input, shape index: {}]
  %s3 = inlined_call_operand.hbm [shape: bf16[128,128], index: 3, kind: input, shape index: {}]
  %s4 = inlined_call_operand.vmem [shape: f32[1,128], index: 4, kind: input, shape index: {}]
  %s5 = inlined_call_operand.hbm [shape: bf16[128,128], index: 5, kind: input, shape index: {}]
  %s6 = inlined_call_operand.vmem [shape: f32[1,128], index: 6, kind: input, shape index: {}]
  %s7 = inlined_call_operand.hbm [shape: f32[8,128], index: 7, kind: output, shape index: {}]
  %s8 = sld [smem:[#allocation0]]
  $region54: #{tpu_custom_call.1} parent=0
    _
  %s10 = ssub.s32 1, %s8
  %s11 = scalar_select 0, %s10, %s8
  $region1: #{tpu_custom_call.1} parent=0
    #allocation2 [shape = 'u8[4096]{0}', space=vmem, size = 0x1000, scoped, tag = 'input window, operand 0, single buffered']
    #allocation3 [shape = 's32[1]{0}', space=sflag, size = 0x4, scoped, tag = 'scoped memory for tpu_custom_call.1']
    #allocation4 [shape = 's32[1]{0}', space=sflag, size = 0x4, scoped, tag = 'scoped memory for tpu_custom_call.1']
    #allocation5 [shape = 'u8[4096]{0}', space=vmem, size = 0x1000, scoped, tag = 'input window, operand 1, single buffered']
    #allocation6 [shape = 's32[1]{0}', space=sflag, size = 0x4, scoped, tag = 'scoped memory for tpu_custom_call.1']
    #allocation7 [shape = 'u8[32768]{0}', space=vmem, size = 0x8000, scoped, tag = 'input window, operand 3, single buffered']
    #allocation8 [shape = 'u8[32768]{0}', space=vmem, size = 0x8000, scoped, tag = 'input window, operand 5, single buffered']
    #allocation9 [shape = 's32[1]{0}', space=sflag, size = 0x4, scoped, tag = 'scoped memory for tpu_custom_call.1']
    #allocation10 [shape = 'u8[4096]{0}', space=vmem, size = 0x1000, scoped, tag = 'output window, operand 0, single buffered']
    %12 = vsyncpa [#allocation3], 0
    %13 = vsyncpa [#allocation6], 0
    %14 = vsyncpa [#allocation9], 0
    %15 = vsyncpa [#allocation4], 0
    // Predicated region
    $region2: #{tpu_custom_call.1} parent=1 // pred_check
      _
    $region3: #{tpu_custom_call.1} parent=1 // pred_check_branch
      %17 = sbr.rel (0) target = $region5
    $region4: #{tpu_custom_call.1} parent=1 // pred_region
      %19 = vsyncadd [#allocation3], 0
      %s21 = sshll.u32 %s0, 4
      %s22 = int_to_ptr.hbm [resolvable:$true] %s21
      %s23 = sshll.u32 [#allocation2], 4
      %s24 = int_to_ptr.vmem [resolvable:$true] %s23
      %26 = dma.hbm_to_vmem [thread:$0]  %s22, 128, %s24, [#allocation3]
    $region5: #{tpu_custom_call.1} parent=1 // pred_fallthru
      _
    // Predicated region
    $region6: #{tpu_custom_call.1} parent=1 // pred_check
      _
    $region7: #{tpu_custom_call.1} parent=1 // pred_check_branch
      %28 = sbr.rel (0) target = $region9
    $region8: #{tpu_custom_call.1} parent=1 // pred_region
      %30 = vsyncadd [#allocation6], 0
      %s31 = sshll.u32 %s1, 4
      %s32 = int_to_ptr.hbm [resolvable:$true] %s31
      %s33 = sshll.u32 [#allocation5], 4
      %s34 = int_to_ptr.vmem [resolvable:$true] %s33
      %39 = dma.hbm_to_vmem [thread:$0]  %s32, 128, %s34, [#allocation6], 64, 64, 4
    $region9: #{tpu_custom_call.1} parent=1 // pred_fallthru
      _
    // Predicated region
    $region10: #{tpu_custom_call.1} parent=1 // pred_check
      _
    $region11: #{tpu_custom_call.1} parent=1 // pred_check_branch
      %41 = sbr.rel (0) target = $region13
    $region12: #{tpu_custom_call.1} parent=1 // pred_region
      _
    $region13: #{tpu_custom_call.1} parent=1 // pred_fallthru
      _
    // Predicated region
    $region14: #{tpu_custom_call.1} parent=1 // pred_check
      _
    $region15: #{tpu_custom_call.1} parent=1 // pred_check_branch
      %43 = sbr.rel (0) target = $region17
    $region16: #{tpu_custom_call.1} parent=1 // pred_region
      %45 = vsyncadd [#allocation6], 0
      %s46 = sshll.u32 %s3, 4
      %s47 = int_to_ptr.hbm [resolvable:$true] %s46
      %s48 = sshll.u32 [#allocation7], 4
      %s49 = int_to_ptr.vmem [resolvable:$true] %s48
      %54 = dma.hbm_to_vmem [thread:$0]  %s47, 1024, %s49, [#allocation6], 64, 64, 4
    $region17: #{tpu_custom_call.1} parent=1 // pred_fallthru
      _
    // Predicated region
    $region18: #{tpu_custom_call.1} parent=1 // pred_check
      _
    $region19: #{tpu_custom_call.1} parent=1 // pred_check_branch
      %56 = sbr.rel (0) target = $region21
    $region20: #{tpu_custom_call.1} parent=1 // pred_region
      _
    $region21: #{tpu_custom_call.1} parent=1 // pred_fallthru
      _
    // Predicated region
    $region22: #{tpu_custom_call.1} parent=1 // pred_check
      _
    $region23: #{tpu_custom_call.1} parent=1 // pred_check_branch
      %58 = sbr.rel (0) target = $region25
    $region24: #{tpu_custom_call.1} parent=1 // pred_region
      %60 = vsyncadd [#allocation9], 0
      %s61 = sshll.u32 %s5, 4
      %s62 = int_to_ptr.hbm [resolvable:$true] %s61
      %s63 = sshll.u32 [#allocation8], 4
      %s64 = int_to_ptr.vmem [resolvable:$true] %s63
      %69 = dma.hbm_to_vmem [thread:$0]  %s62, 1024, %s64, [#allocation9], 64, 64, 4
    $region25: #{tpu_custom_call.1} parent=1 // pred_fallthru
      _
    // Predicated region
    $region26: #{tpu_custom_call.1} parent=1 // pred_check
      _
    $region27: #{tpu_custom_call.1} parent=1 // pred_check_branch
      %71 = sbr.rel (0) target = $region29
    $region28: #{tpu_custom_call.1} parent=1 // pred_region
      _
    $region29: #{tpu_custom_call.1} parent=1 // pred_fallthru
      _
    // Predicated region
    $region30: #{tpu_custom_call.1} parent=1 // pred_check
      _
    $region31: #{tpu_custom_call.1} parent=1 // pred_check_branch
      %73 = sbr.rel (0) target = $region33
    $region32: #{tpu_custom_call.1} parent=1 // pred_region
      %75 = dma.done [#allocation3], 128
    $region33: #{tpu_custom_call.1} parent=1 // pred_fallthru
      _
    // Predicated region
    $region34: #{tpu_custom_call.1} parent=1 // pred_check
      _
    $region35: #{tpu_custom_call.1} parent=1 // pred_check_branch
      %77 = sbr.rel (0) target = $region37
    $region36: #{tpu_custom_call.1} parent=1 // pred_region
      %79 = dma.done [#allocation6], 128
    $region37: #{tpu_custom_call.1} parent=1 // pred_fallthru
      _
    // Predicated region
    $region38: #{tpu_custom_call.1} parent=1 // pred_check
      _
    $region39: #{tpu_custom_call.1} parent=1 // pred_check_branch
      %81 = sbr.rel (0) target = $region41
    $region40: #{tpu_custom_call.1} parent=1 // pred_region
      %83 = dma.done [#allocation6], 1024
    $region41: #{tpu_custom_call.1} parent=1 // pred_fallthru
      _
    // Predicated region
    $region42: #{tpu_custom_call.1} parent=1 // pred_check
      _
    $region43: #{tpu_custom_call.1} parent=1 // pred_check_branch
      %85 = sbr.rel (0) target = $region45
    $region44: #{tpu_custom_call.1} parent=1 // pred_region
      %87 = dma.done [#allocation9], 1024
    $region45: #{tpu_custom_call.1} parent=1 // pred_fallthru
      _
    %v89 = vld [vmem:[#allocation2] sm:$0xff]
    %v90 = vld [vmem:[#allocation5] sm:$0xf]
    %v91 = vld [vmem:[#allocation5 + $0x4] sm:$0xf]
    %v92 = vld [vmem:[%s2] sm:$0x1]
    %v93 = vld [vmem:[#allocation7] sm:$0xf]
    %v94 = vld [vmem:[#allocation7 + $0x4] sm:$0xf]
    %v95 = vld [vmem:[#allocation7 + $0x8] sm:$0xf]
    %v96 = vld [vmem:[#allocation7 + $0xc] sm:$0xf]
    %v97 = vld [vmem:[#allocation7 + $0x10] sm:$0xf]
    %v98 = vld [vmem:[#allocation7 + $0x14] sm:$0xf]
    %v99 = vld [vmem:[#allocation7 + $0x18] sm:$0xf]
    %v100 = vld [vmem:[#allocation7 + $0x1c] sm:$0xf]
    %v101 = vld [vmem:[#allocation7 + $0x20] sm:$0xf]
    %v102 = vld [vmem:[#allocation7 + $0x24] sm:$0xf]
    %v103 = vld [vmem:[#allocation7 + $0x28] sm:$0xf]
    %v104 = vld [vmem:[#allocation7 + $0x2c] sm:$0xf]
    %v105 = vld [vmem:[#allocation7 + $0x30] sm:$0xf]
    %v106 = vld [vmem:[#allocation7 + $0x34] sm:$0xf]
    %v107 = vld [vmem:[#allocation7 + $0x38] sm:$0xf]
    %v108 = vld [vmem:[#allocation7 + $0x3c] sm:$0xf]
    %v109 = vld [vmem:[%s4] sm:$0x1]
    %v110 = vld [vmem:[#allocation8] sm:$0xf]
    %v111 = vld [vmem:[#allocation8 + $0x4] sm:$0xf]
    %v112 = vld [vmem:[#allocation8 + $0x8] sm:$0xf]
    %v113 = vld [vmem:[#allocation8 + $0xc] sm:$0xf]
    %v114 = vld [vmem:[#allocation8 + $0x10] sm:$0xf]
    %v115 = vld [vmem:[#allocation8 + $0x14] sm:$0xf]
    %v116 = vld [vmem:[#allocation8 + $0x18] sm:$0xf]
    %v117 = vld [vmem:[#allocation8 + $0x1c] sm:$0xf]
    %v118 = vld [vmem:[#allocation8 + $0x20] sm:$0xf]
    %v119 = vld [vmem:[#allocation8 + $0x24] sm:$0xf]
    %v120 = vld [vmem:[#allocation8 + $0x28] sm:$0xf]
    %v121 = vld [vmem:[#allocation8 + $0x2c] sm:$0xf]
    %v122 = vld [vmem:[#allocation8 + $0x30] sm:$0xf]
    %v123 = vld [vmem:[#allocation8 + $0x34] sm:$0xf]
    %v124 = vld [vmem:[#allocation8 + $0x38] sm:$0xf]
    %v125 = vld [vmem:[#allocation8 + $0x3c] sm:$0xf]
    %v126 = vld [vmem:[%s6] sm:$0x1]
    %v127 = vpack.c.bf16 %v89, %v89
    %v129 = vperm.slane %v92, 0
    %v133 = vunpack.c.l.b16 %v90
    %v134 = vunpack.c.l.b16 %v91
    %v135 = vpack.c.b16 %v134, %v133
    %vm137 = vcmask 130048
    %v139 = vsel %vm137, %v127, 0
    %141 = vmatpush.bf16.msra.mxu0 0
    %142 = vmatpush.bf16.msra.mxu0 0
    %143 = vmatpush.bf16.msra.mxu0 0
    %144 = vmatpush.bf16.msra.mxu0 0
    %145 = vmatpush.bf16.msra.mxu0 0
    %146 = vmatpush.bf16.msra.mxu0 0
    %147 = vmatpush.bf16.msra.mxu0 0
    %148 = vmatpush.bf16.msra.mxu0 %v135
    %149 = vmatmul.bf16.gmra.mxu0 %v139
    %v150 = vpop.f32.mrf.mxu0
    %v151 = vadd.f32 %v129, %v150
    %v152 = vpop.f32.mrf.mxu0
    %153 = vdwg.mxu0
    %v154 = vmax.f32 %v151, 0.0
    %v155 = vpack.c.bf16 %v154, %v154
    %v157 = vperm.slane %v109, 0
    %v175 = vunpack.c.l.b16 %v93
    %v176 = vunpack.c.l.b16 %v94
    %v177 = vunpack.c.l.b16 %v95
    %v178 = vunpack.c.l.b16 %v96
    %v179 = vunpack.c.l.b16 %v97
    %v180 = vunpack.c.l.b16 %v98
    %v181 = vunpack.c.l.b16 %v99
    %v182 = vunpack.c.l.b16 %v100
    %v183 = vunpack.c.l.b16 %v101
    %v184 = vunpack.c.l.b16 %v102
    %v185 = vunpack.c.l.b16 %v103
    %v186 = vunpack.c.l.b16 %v104
    %v187 = vunpack.c.l.b16 %v105
    %v188 = vunpack.c.l.b16 %v106
    %v189 = vunpack.c.l.b16 %v107
    %v190 = vunpack.c.l.b16 %v108
    %v191 = vpack.c.b16 %v176, %v175
    %v192 = vpack.c.b16 %v178, %v177
    %v193 = vpack.c.b16 %v180, %v179
    %v194 = vpack.c.b16 %v182, %v181
    %v195 = vpack.c.b16 %v184, %v183
    %v196 = vpack.c.b16 %v186, %v185
    %v197 = vpack.c.b16 %v188, %v187
    %v198 = vpack.c.b16 %v190, %v189
    %207 = vmatpush.bf16.msra.mxu0 %v198
    %208 = vmatpush.bf16.msra.mxu0 %v197
    %209 = vmatpush.bf16.msra.mxu0 %v196
    %210 = vmatpush.bf16.msra.mxu0 %v195
    %211 = vmatpush.bf16.msra.mxu0 %v194
    %212 = vmatpush.bf16.msra.mxu0 %v193
    %213 = vmatpush.bf16.msra.mxu0 %v192
    %214 = vmatpush.bf16.msra.mxu0 %v191
    %215 = vmatmul.bf16.gmra.mxu0 %v155
    %v216 = vpop.f32.mrf.mxu0
    %v217 = vadd.f32 %v157, %v216
    %v218 = vpop.f32.mrf.mxu0
    %219 = vdwg.mxu0
    %v220 = vmax.f32 %v217, 0.0
    %v221 = vpack.c.bf16 %v220, %v220
    %v223 = vperm.slane %v126, 0
    %v241 = vunpack.c.l.b16 %v110
    %v242 = vunpack.c.l.b16 %v111
    %v243 = vunpack.c.l.b16 %v112
    %v244 = vunpack.c.l.b16 %v113
    %v245 = vunpack.c.l.b16 %v114
    %v246 = vunpack.c.l.b16 %v115
    %v247 = vunpack.c.l.b16 %v116
    %v248 = vunpack.c.l.b16 %v117
    %v249 = vunpack.c.l.b16 %v118
    %v250 = vunpack.c.l.b16 %v119
    %v251 = vunpack.c.l.b16 %v120
    %v252 = vunpack.c.l.b16 %v121
    %v253 = vunpack.c.l.b16 %v122
    %v254 = vunpack.c.l.b16 %v123
    %v255 = vunpack.c.l.b16 %v124
    %v256 = vunpack.c.l.b16 %v125
    %v257 = vpack.c.b16 %v242, %v241
    %v258 = vpack.c.b16 %v244, %v243
    %v259 = vpack.c.b16 %v246, %v245
    %v260 = vpack.c.b16 %v248, %v247
    %v261 = vpack.c.b16 %v250, %v249
    %v262 = vpack.c.b16 %v252, %v251
    %v263 = vpack.c.b16 %v254, %v253
    %v264 = vpack.c.b16 %v256, %v255
    %273 = vmatpush.bf16.msra.mxu0 %v264
    %274 = vmatpush.bf16.msra.mxu0 %v263
    %275 = vmatpush.bf16.msra.mxu0 %v262
    %276 = vmatpush.bf16.msra.mxu0 %v261
    %277 = vmatpush.bf16.msra.mxu0 %v260
    %278 = vmatpush.bf16.msra.mxu0 %v259
    %279 = vmatpush.bf16.msra.mxu0 %v258
    %280 = vmatpush.bf16.msra.mxu0 %v257
    %281 = vmatmul.bf16.gmra.mxu0 %v221
    %v282 = vpop.f32.mrf.mxu0
    %v283 = vadd.f32 %v223, %v282
    %v284 = vpop.f32.mrf.mxu0
    %285 = vdwg.mxu0
    %286 = vst [vmem:[#allocation10] sm:$0xff] %v283
    // Predicated region
    $region46: #{tpu_custom_call.1} parent=1 // pred_check
      _
    $region47: #{tpu_custom_call.1} parent=1 // pred_check_branch
      %288 = sbr.rel (0) target = $region49
    $region48: #{tpu_custom_call.1} parent=1 // pred_region
      %290 = vsyncadd [#allocation4], 0
      %s292 = sshll.u32 [#allocation10], 4
      %s293 = int_to_ptr.vmem [resolvable:$true] %s292
      %s294 = sshll.u32 %s7, 4
      %s295 = int_to_ptr.hbm [resolvable:$true] %s294
      %297 = dma.vmem_to_hbm [thread:$0]  %s293, 128, %s295, [#allocation4]
    $region49: #{tpu_custom_call.1} parent=1 // pred_fallthru
      _
    // Predicated region
    $region50: #{tpu_custom_call.1} parent=1 // pred_check
      _
    $region51: #{tpu_custom_call.1} parent=1 // pred_check_branch
      %299 = sbr.rel (0) target = $region53
    $region52: #{tpu_custom_call.1} parent=1 // pred_region
      %301 = dma.done [#allocation4], 128
    $region53: #{tpu_custom_call.1} parent=1 // pred_fallthru
      _
    %302 = vsyncpa [#allocation3], 1
    %303 = vsyncpa [#allocation6], 1
    %304 = vsyncpa [#allocation9], 1
    %305 = vsyncpa [#allocation4], 1

</llo_original>
